<compile_context>
chip_gen: v7x
topology: tpu7x:2x2x1
jax: 0.10.0
libtpu: 0.0.40
codegen_flags: <defaults>
</compile_context>

<pallas_src>
import functools
import math

import jax
import jax.numpy as jnp
from jax import lax
from jax.experimental import pallas as pl
from jax.experimental.pallas import tpu as pltpu


# ---------------------------------------------------------------------------
# Pallas kernel: one lane tile of  new_sum = sum - evicted + x ;  mean = new_sum/B
# ---------------------------------------------------------------------------
def _ma_update_kernel(evicted_ref, x_ref, sum_ref, newsum_ref, mean_ref, *, inv_b):
    x32 = x_ref[...].astype(jnp.float32)
    new_sum = sum_ref[...] - evicted_ref[...].astype(jnp.float32) + x32
    newsum_ref[...] = new_sum
    mean_ref[...] = (new_sum * inv_b).astype(mean_ref.dtype)


def _round_up(n, m):
    return ((n + m - 1) // m) * m


def _pick_tile(f_pad):
    # Largest lane-dense tile that still leaves >= 2 grid steps (megacore on
    # v7x); otherwise fall back to a single full-extent (already 128-aligned)
    # block.  Footprint per tile is tiny, so no per-generation VMEM cap needed.
    for t in (8192, 4096, 2048, 1024, 512, 256, 128):
        if f_pad % t == 0 and f_pad // t >= 2:
            return t
    return f_pad


def _ring_update(evicted, x2, running_sum, buffer_size):
    """evicted/x2: (1, F_pad) in ring dtype; running_sum: (1, F_pad) f32."""
    _, f_pad = x2.shape
    dtype = x2.dtype
    tf = _pick_tile(f_pad)
    grid = (f_pad // tf,)
    itemsize = jnp.dtype(dtype).itemsize

    row_spec = pl.BlockSpec((1, tf), lambda j: (0, j))

    return pl.pallas_call(
        functools.partial(_ma_update_kernel, inv_b=1.0 / buffer_size),
        out_shape=(jax.ShapeDtypeStruct((1, f_pad), jnp.float32),   # new running sum
                   jax.ShapeDtypeStruct((1, f_pad), dtype)),         # mean
        grid_spec=pltpu.PrefetchScalarGridSpec(
            num_scalar_prefetch=0,
            grid=grid,
            in_specs=[row_spec, row_spec, row_spec],
            out_specs=(row_spec, row_spec)),
        # running_sum (input 2) aliases new running sum (output 0): same column
        # tile in -> same column tile out, read fully before the store.
        input_output_aliases={2: 0},
        compiler_params=pltpu.CompilerParams(dimension_semantics=("parallel",)),
        cost_estimate=pl.CostEstimate(
            flops=3 * f_pad,
            transcendentals=0,
            bytes_accessed=f_pad * (3 * itemsize + 2 * 4)),
    )(evicted, x2, running_sum)


# ---------------------------------------------------------------------------
# Functional MovingAverage: init / step / helpers
# ---------------------------------------------------------------------------
def init_moving_average(size, buffer_size=128, init_value=0.0, dtype=jnp.float32):
    """Returns state (ring, ptr, running_sum) equivalent to the torch buffer."""
    f = max(1, math.prod(size))
    f_pad = max(128, _round_up(f, 128))
    ring = jnp.full((buffer_size, f_pad), init_value, dtype=dtype)
    running_sum = jnp.sum(ring.astype(jnp.float32), axis=0, keepdims=True)
    ptr = jnp.zeros((), dtype=jnp.int32)
    return ring, ptr, running_sum


def refresh_running_sum(ring):
    """Exact O(B*F) recompute of the carried sum (optional periodic re-sync)."""
    return jnp.sum(ring.astype(jnp.float32), axis=0, keepdims=True)


def materialize_buffer(ring, ptr, size):
    """Recover the torch-ordered buffer (oldest row first). Verification only."""
    b = ring.shape[0]
    f = max(1, math.prod(size))
    return jnp.roll(ring, -ptr, axis=0)[:, :f].reshape((b,) + tuple(size))


def _moving_average_step(ring, ptr, running_sum, x):
    buffer_size, f_pad = ring.shape
    size = x.shape
    f = max(1, math.prod(size))

    x2 = x.reshape(1, f).astype(ring.dtype)
    if f_pad != f:  # keep the lane axis 128-dense for irregular feature sizes
        x2 = jnp.pad(x2, ((0, 0), (0, f_pad - f)))

    zero = jnp.zeros((), dtype=ptr.dtype)
    evicted = lax.dynamic_slice(ring, (ptr, zero), (1, f_pad))          # O(F) read
    new_ring = lax.dynamic_update_slice(ring, x2, (ptr, zero))          # O(F) in-place write

    new_sum, mean = _ring_update(evicted, x2, running_sum, buffer_size)  # Pallas, O(F)

    new_ptr = (ptr + 1) % buffer_size
    mean = mean[0, :f].reshape(size)
    return new_ring, new_ptr, new_sum, mean


# Donate the ring and the running sum so the row write / sum update are in place.
moving_average_step = jax.jit(_moving_average_step, donate_argnums=(0, 2))


# ---------------------------------------------------------------------------
# Test vs. the pure-JAX reference of the torch module
# ---------------------------------------------------------------------------
if __name__ == "__main__":
    key = jax.random.PRNGKey(0)

    def check_case(key, size, buffer_size, init_value, steps, dtype=jnp.float32):
        ring, ptr, running_sum = init_moving_average(size, buffer_size, init_value, dtype)
        ref_buffer = jnp.full((buffer_size,) + tuple(size), init_value, dtype=dtype)

        for _ in range(steps):
            key, sub = jax.random.split(key)
            x = jax.random.normal(sub, size, dtype=dtype)

            ring, ptr, running_sum, out = moving_average_step(ring, ptr, running_sum, x)
            jax.block_until_ready((ring, ptr, running_sum, out))

            # Reference: exact torch semantics.
            ref_buffer = jnp.concatenate([ref_buffer[1:], x[None]], axis=0)
            ref_out = ref_buffer.mean(axis=0)

            assert out.shape == tuple(size)
            logical = materialize_buffer(ring, ptr, size)
            assert bool(jnp.all(logical == ref_buffer)), "buffer mismatch"
            assert jnp.allclose(out, ref_out, atol=1e-5, rtol=1e-5), "mean mismatch"
        return key

    # Lane-dense feature shape; > buffer_size steps exercises ring wrap-around.
    key = check_case(key, size=(8, 256), buffer_size=16, init_value=0.0, steps=20)
    # Irregular feature shape; exercises the 128-lane padding path.
    key = check_case(key, size=(5, 7), buffer_size=4, init_value=0.5, steps=6)

    print("KERNEL_OK")
</pallas_src>

<mosaic_0001>
module attributes {stable_mosaic.version = 11 : i64} {
  func.func @_ma_update_kernel(%arg0: i32, %arg1: memref<1x1024xf32, #tpu.memory_space<vmem>>, %arg2: memref<1x1024xf32, #tpu.memory_space<vmem>>, %arg3: memref<1x1024xf32, #tpu.memory_space<vmem>>, %arg4: memref<1x1024xf32, #tpu.memory_space<vmem>>, %arg5: memref<1x1024xf32, #tpu.memory_space<vmem>>) attributes {dimension_semantics = [#tpu.dimension_semantics<parallel>], iteration_bounds = array<i64: 2>, scalar_prefetch = 0 : i64, scratch_operands = 0 : i64, tpu.core_type = #tpu.core_type<tc>, window_params = [{transform_indices = @transform_0, window_bounds = array<i64: 1, 1024>}, {transform_indices = @transform_1, window_bounds = array<i64: 1, 1024>}, {transform_indices = @transform_2, window_bounds = array<i64: 1, 1024>}, {transform_indices = @transform_3, window_bounds = array<i64: 1, 1024>}, {transform_indices = @transform_4, window_bounds = array<i64: 1, 1024>}]} {
    %c0 = arith.constant 0 : index
    %c0_0 = arith.constant 0 : index
    %0 = vector.load %arg2[%c0, %c0_0] : memref<1x1024xf32, #tpu.memory_space<vmem>>, vector<1x1024xf32>
    %c0_1 = arith.constant 0 : index
    %c0_2 = arith.constant 0 : index
    %1 = vector.load %arg3[%c0_1, %c0_2] : memref<1x1024xf32, #tpu.memory_space<vmem>>, vector<1x1024xf32>
    %c0_3 = arith.constant 0 : index
    %c0_4 = arith.constant 0 : index
    %2 = vector.load %arg1[%c0_3, %c0_4] : memref<1x1024xf32, #tpu.memory_space<vmem>>, vector<1x1024xf32>
    %3 = arith.subf %1, %2 : vector<1x1024xf32>
    %4 = arith.addf %3, %0 : vector<1x1024xf32>
    %c0_5 = arith.constant 0 : index
    %c0_6 = arith.constant 0 : index
    %5 = vector.load %arg4[%c0_5, %c0_6] : memref<1x1024xf32, #tpu.memory_space<vmem>>, vector<1x1024xf32>
    tpu.vector_store %arg4[%c0_5, %c0_6], %4 {strides = array<i32>} : memref<1x1024xf32, #tpu.memory_space<vmem>>, vector<1x1024xf32>,
    %cst = arith.constant 6.250000e-02 : f32
    %6 = vector.broadcast %cst : f32 to vector<1x1024xf32>
    %7 = arith.mulf %4, %6 : vector<1x1024xf32>
    %c0_7 = arith.constant 0 : index
    %c0_8 = arith.constant 0 : index
    %8 = vector.load %arg5[%c0_7, %c0_8] : memref<1x1024xf32, #tpu.memory_space<vmem>>, vector<1x1024xf32>
    tpu.vector_store %arg5[%c0_7, %c0_8], %7 {strides = array<i32>} : memref<1x1024xf32, #tpu.memory_space<vmem>>, vector<1x1024xf32>,
    return
  }
  func.func @transform_0(%arg0: i32) -> (i32, i32) {
    %c0_i32 = arith.constant 0 : i32
    %c0_i32_0 = arith.constant 0 : i32
    return %c0_i32, %arg0 : i32, i32
  }
  func.func @transform_1(%arg0: i32) -> (i32, i32) {
    %c0_i32 = arith.constant 0 : i32
    %c0_i32_0 = arith.constant 0 : i32
    return %c0_i32, %arg0 : i32, i32
  }
  func.func @transform_2(%arg0: i32) -> (i32, i32) {
    %c0_i32 = arith.constant 0 : i32
    %c0_i32_0 = arith.constant 0 : i32
    return %c0_i32, %arg0 : i32, i32
  }
  func.func @transform_3(%arg0: i32) -> (i32, i32) {
    %c0_i32 = arith.constant 0 : i32
    %c0_i32_0 = arith.constant 0 : i32
    return %c0_i32, %arg0 : i32, i32
  }
  func.func @transform_4(%arg0: i32) -> (i32, i32) {
    %c0_i32 = arith.constant 0 : i32
    %c0_i32_0 = arith.constant 0 : i32
    return %c0_i32, %arg0 : i32, i32
  }
}

</mosaic_0001>

<llo_original>
// kernel: squeeze.1
$region0: #{squeeze.1}
  %s0 = inlined_call_operand.vmem [shape: f32[2048], index: 0, kind: input, shape index: {}]
  %s1 = inlined_call_operand.hbm [shape: f32[8,256], index: 1, kind: output, shape index: {}]
  $region1: #{squeeze.1} parent=0
    #allocation0 [shape = 'u8[8192]{0}', space=vmem, size = 0x2000, scoped, tag = 'operand span for operand 1']
    #allocation1 [shape = 's32[1]{0}', space=sflag, size = 0x4, scoped, tag = 'scoped memory for squeeze.1']
    %2 = vsyncpa [#allocation1], 0
    %v3 = vld [vmem:[%s0] sm:$0xff]
    %4 = vst [vmem:[#allocation0] ss:$8 sm:$0x3] %v3
    %s5 = scalar_lea.vmem [#allocation0], 4294967281
    %6 = vst [vmem:[%s5] ss:$8 sm:$0xc] %v3
    %s7 = scalar_lea.vmem [#allocation0], 4294967266
    %8 = vst [vmem:[%s7] ss:$8 sm:$0x30] %v3
    %s9 = scalar_lea.vmem [#allocation0], 4294967251
    %10 = vst [vmem:[%s9] ss:$8 sm:$0xc0] %v3
    %s11 = scalar_lea.vmem %s0, 8
    %v12 = vld [vmem:[%s11] sm:$0xff]
    %s13 = scalar_lea.vmem [#allocation0], 4
    %14 = vst [vmem:[%s13] ss:$8 sm:$0x3] %v12
    %s15 = scalar_lea.vmem [#allocation0], 4294967285
    %16 = vst [vmem:[%s15] ss:$8 sm:$0xc] %v12
    %s17 = scalar_lea.vmem [#allocation0], 4294967270
    %18 = vst [vmem:[%s17] ss:$8 sm:$0x30] %v12
    %s19 = scalar_lea.vmem [#allocation0], 4294967255
    %20 = vst [vmem:[%s19] ss:$8 sm:$0xc0] %v12
    %s22 = ssub.s32 256, 256
    %23 = vsyncadd [#allocation1], %s22
    %s25 = sshll.u32 [#allocation0], 4
    %s26 = int_to_ptr.vmem [resolvable:$true] %s25
    %28 = dma.vmem_to_hbm [thread:$0]  %s26, 256, %s1, [#allocation1]
    %29 = dma.done [#allocation1], 256
    %30 = vsyncpa [#allocation1], 1

// kernel: _moving_average_step.1
$region0: #{_moving_average_step.1}
  #allocation0 [shape = 'u32[]', space=smem, size = 0x4, offset = 0x4, fixed_abs, tag = 'smem constant byte address 0x4 - core index']
  #allocation1 [shape = 'u32[144,128]{1,0:T(1,128)}', space=vmem, size = 0x12000, scoped, tag = 'internal scratch']
  %s0 = inlined_call_operand.vmem [shape: f32[1,2048], index: 0, kind: input, shape index: {}]
  %s1 = inlined_call_operand.vmem [shape: f32[1,2048], index: 1, kind: input, shape index: {}]
  %s2 = inlined_call_operand.vmem [shape: f32[1,2048], index: 2, kind: input, shape index: {}, may-alias: {2,3}]
  %s3 = inlined_call_operand.vmem [shape: f32[1,2048], index: 3, kind: output, shape index: {0}, may-alias: {2,3}]
  %s4 = inlined_call_operand.vmem [shape: f32[1,2048], index: 4, kind: output, shape index: {1}]
  %5 = xla_tuple %s3, %s4
  %s6 = sld [smem:[#allocation0]]
  $region53: #{_moving_average_step.1} parent=0
    _
  %s8 = ssub.s32 1, %s6
  %s9 = scalar_select 0, %s8, %s6
  loop: start=0, step=1, limit=4
  $region2: #{_moving_average_step.1} parent=0 // loop_pre_header
    _
  $region3: #{_moving_average_step.1} parent=0 // loop_header
    %s11 = sphi 0, %s15
    %p12 = scmp.ge.s32.totalorder %s11, 4
    %s21 = sphi 0, %s23
    %s24 = sphi 0, %s21
    %s25 = sphi 0, %s24
    %s41 = sphi 0, %s25
    %s47 = sphi 0, %s49
    %s50 = sphi 0, %s47
    %s51 = sphi 0, %s50
    %s67 = sphi 0, %s51
    %s73 = sphi 0, %s75
    %s76 = sphi 0, %s73
    %s77 = sphi 0, %s76
    %s93 = sphi 0, %s77
    %s99 = sphi 0, %s101
    %s102 = sphi 0, %s99
    %s103 = sphi 0, %s102
    %s119 = sphi 0, %s103
    %s125 = sphi 0, %s127
    %s128 = sphi 0, %s125
    %s129 = sphi 0, %s128
    %s145 = sphi 0, %s129
  $region4: #{_moving_average_step.1} parent=0 // loop_header_branch
    %14 = sbr.rel (%p12) target = $region8
  $region5: #{_moving_average_step.1} parent=0 // loop_body
    %s16 = ssub.s32 %s11, 1
    %s17 = ssub.s32 %s11, 2
    %s18 = sadd.s32 %s11, 1
    %s19 = ssub.s32 %s11, %s18
    %p20 = scmp.eq.s32.totalorder %s19, 0
    %s22 = sadd.s32 %s21, 1
    %s23 = scalar_select %p20, %s21, %s22
    %p26 = pneg %p20
    %p27 = scmp.eq.s32.totalorder %s11, 1
    %p28 = por %p26, %p27
    %p29 = scmp.ne.s32.totalorder %s21, %s24
    %p30 = scmp.eq.s32.totalorder %s11, 0
    %p31 = por %p29, %p30
    %p32 = scmp.ne.s32.totalorder %s21, %s24
    %p33 = scmp.eq.s32.totalorder %s16, 1
    %p34 = por %p32, %p33
    %p35 = scmp.ne.s32.totalorder %s24, %s25
    %p36 = scmp.eq.s32.totalorder %s16, 0
    %p37 = por %p35, %p36
    %p38 = scmp.ne.s32.totalorder %s24, %s25
    %p39 = scmp.eq.s32.totalorder %s17, 1
    %p40 = por %p38, %p39
    %p42 = scmp.ne.s32.totalorder %s25, %s41
    %p43 = scmp.eq.s32.totalorder %s17, 0
    %p44 = por %p42, %p43
    %s45 = ssub.s32 %s11, %s18
    %p46 = scmp.eq.s32.totalorder %s45, 0
    %s48 = sadd.s32 %s47, 1
    %s49 = scalar_select %p46, %s47, %s48
    %p52 = pneg %p46
    %p53 = scmp.eq.s32.totalorder %s11, 1
    %p54 = por %p52, %p53
    %p55 = scmp.ne.s32.totalorder %s47, %s50
    %p56 = scmp.eq.s32.totalorder %s11, 0
    %p57 = por %p55, %p56
    %p58 = scmp.ne.s32.totalorder %s47, %s50
    %p59 = scmp.eq.s32.totalorder %s16, 1
    %p60 = por %p58, %p59
    %p61 = scmp.ne.s32.totalorder %s50, %s51
    %p62 = scmp.eq.s32.totalorder %s16, 0
    %p63 = por %p61, %p62
    %p64 = scmp.ne.s32.totalorder %s50, %s51
    %p65 = scmp.eq.s32.totalorder %s17, 1
    %p66 = por %p64, %p65
    %p68 = scmp.ne.s32.totalorder %s51, %s67
    %p69 = scmp.eq.s32.totalorder %s17, 0
    %p70 = por %p68, %p69
    %s71 = ssub.s32 %s11, %s18
    %p72 = scmp.eq.s32.totalorder %s71, 0
    %s74 = sadd.s32 %s73, 1
    %s75 = scalar_select %p72, %s73, %s74
    %p78 = pneg %p72
    %p79 = scmp.eq.s32.totalorder %s11, 1
    %p80 = por %p78, %p79
    %p81 = scmp.ne.s32.totalorder %s73, %s76
    %p82 = scmp.eq.s32.totalorder %s11, 0
    %p83 = por %p81, %p82
    %p84 = scmp.ne.s32.totalorder %s73, %s76
    %p85 = scmp.eq.s32.totalorder %s16, 1
    %p86 = por %p84, %p85
    %p87 = scmp.ne.s32.totalorder %s76, %s77
    %p88 = scmp.eq.s32.totalorder %s16, 0
    %p89 = por %p87, %p88
    %p90 = scmp.ne.s32.totalorder %s76, %s77
    %p91 = scmp.eq.s32.totalorder %s17, 1
    %p92 = por %p90, %p91
    %p94 = scmp.ne.s32.totalorder %s77, %s93
    %p95 = scmp.eq.s32.totalorder %s17, 0
    %p96 = por %p94, %p95
    %s97 = ssub.s32 %s11, %s18
    %p98 = scmp.eq.s32.totalorder %s97, 0
    %s100 = sadd.s32 %s99, 1
    %s101 = scalar_select %p98, %s99, %s100
    %p104 = pneg %p98
    %p105 = scmp.eq.s32.totalorder %s11, 1
    %p106 = por %p104, %p105
    %p107 = scmp.ne.s32.totalorder %s99, %s102
    %p108 = scmp.eq.s32.totalorder %s11, 0
    %p109 = por %p107, %p108
    %p110 = scmp.ne.s32.totalorder %s99, %s102
    %p111 = scmp.eq.s32.totalorder %s16, 1
    %p112 = por %p110, %p111
    %p113 = scmp.ne.s32.totalorder %s102, %s103
    %p114 = scmp.eq.s32.totalorder %s16, 0
    %p115 = por %p113, %p114
    %p116 = scmp.ne.s32.totalorder %s102, %s103
    %p117 = scmp.eq.s32.totalorder %s17, 1
    %p118 = por %p116, %p117
    %p120 = scmp.ne.s32.totalorder %s103, %s119
    %p121 = scmp.eq.s32.totalorder %s17, 0
    %p122 = por %p120, %p121
    %s123 = ssub.s32 %s11, %s18
    %p124 = scmp.eq.s32.totalorder %s123, 0
    %s126 = sadd.s32 %s125, 1
    %s127 = scalar_select %p124, %s125, %s126
    %p130 = pneg %p124
    %p131 = scmp.eq.s32.totalorder %s11, 1
    %p132 = por %p130, %p131
    %p133 = scmp.ne.s32.totalorder %s125, %s128
    %p134 = scmp.eq.s32.totalorder %s11, 0
    %p135 = por %p133, %p134
    %p136 = scmp.ne.s32.totalorder %s125, %s128
    %p137 = scmp.eq.s32.totalorder %s16, 1
    %p138 = por %p136, %p137
    %p139 = scmp.ne.s32.totalorder %s128, %s129
    %p140 = scmp.eq.s32.totalorder %s16, 0
    %p141 = por %p139, %p140
    %p142 = scmp.ne.s32.totalorder %s128, %s129
    %p143 = scmp.eq.s32.totalorder %s17, 1
    %p144 = por %p142, %p143
    %p146 = scmp.ne.s32.totalorder %s129, %s145
    %p147 = scmp.eq.s32.totalorder %s17, 0
    %p148 = por %p146, %p147
    %p149 = scmp.le.s32.totalorder 1, %s11
    %p150 = scmp.lt.s32.totalorder %s11, 3
    %p151 = pnand %p149, %p150
    %p152 = pneg %p151
    // Predicated region
    $region9: #{_moving_average_step.1} parent=5 // pred_check
      _
    $region10: #{_moving_average_step.1} parent=5 // pred_check_branch
      %154 = sbr.rel (%p151) target = $region12
    $region11: #{_moving_average_step.1} parent=5 // pred_region
      %s155 = ssub.s32 %s11, 1
    $region12: #{_moving_average_step.1} parent=5 // pred_fallthru
      _
    %p156 = scmp.lt.s32.totalorder %s11, 2
    // Predicated region
    $region13: #{_moving_average_step.1} parent=5 // pred_check
      %p157 = pneg %p156
    $region14: #{_moving_average_step.1} parent=5 // pred_check_branch
      %159 = sbr.rel (%p157) target = $region16
    $region15: #{_moving_average_step.1} parent=5 // pred_region
      // Predicated region
      $region17: #{_moving_average_step.1} parent=15 // pred_check
        %p160 = pneg %p31
      $region18: #{_moving_average_step.1} parent=15 // pred_check_branch
        %162 = sbr.rel (%p160) target = $region20
      $region19: #{_moving_average_step.1} parent=15 // pred_region
        %s163 = smul.u32 8, %s11
        %p164 = scmp.lt.s32.totalorder %s163, 15
        %s165 = scalar_select %p164, %s163, 15
        %s166 = scalar_lea.vmem %s0, %s165
        %s167 = smul.u32 8, %s11
      $region20: #{_moving_average_step.1} parent=15 // pred_fallthru
        _
      // Predicated region
      $region21: #{_moving_average_step.1} parent=15 // pred_check
        %p168 = pneg %p57
      $region22: #{_moving_average_step.1} parent=15 // pred_check_branch
        %170 = sbr.rel (%p168) target = $region24
      $region23: #{_moving_average_step.1} parent=15 // pred_region
        %s171 = smul.u32 8, %s11
        %p172 = scmp.lt.s32.totalorder %s171, 15
        %s173 = scalar_select %p172, %s171, 15
        %s174 = scalar_lea.vmem %s1, %s173
        %s175 = smul.u32 8, %s11
      $region24: #{_moving_average_step.1} parent=15 // pred_fallthru
        _
      // Predicated region
      $region25: #{_moving_average_step.1} parent=15 // pred_check
        %p176 = pneg %p83
      $region26: #{_moving_average_step.1} parent=15 // pred_check_branch
        %178 = sbr.rel (%p176) target = $region28
      $region27: #{_moving_average_step.1} parent=15 // pred_region
        %s179 = smul.u32 8, %s11
        %p180 = scmp.lt.s32.totalorder %s179, 15
        %s181 = scalar_select %p180, %s179, 15
        %s182 = scalar_lea.vmem %s2, %s181
        %s183 = smul.u32 8, %s11
      $region28: #{_moving_average_step.1} parent=15 // pred_fallthru
        _
    $region16: #{_moving_average_step.1} parent=5 // pred_fallthru
      _
    %p184 = scmp.le.s32.totalorder 1, %s11
    %p185 = scmp.lt.s32.totalorder %s11, 3
    %p186 = pnand %p184, %p185
    %p187 = pneg %p186
    // Predicated region
    $region29: #{_moving_average_step.1} parent=5 // pred_check
      _
    $region30: #{_moving_average_step.1} parent=5 // pred_check_branch
      %189 = sbr.rel (%p186) target = $region32
    $region31: #{_moving_average_step.1} parent=5 // pred_region
      %s190 = ssub.s32 %s11, 1
      %s191 = smul.u32 8, %s16
      %p192 = scmp.lt.s32.totalorder %s191, 15
      %s193 = scalar_select %p192, %s191, 15
      %s194 = scalar_lea.vmem %s0, %s193
      %p195 = pneg %p37
      %p196 = pneg %p34
      %s197 = smul.u32 8, %s16
      %p198 = scmp.lt.s32.totalorder %s197, 15
      %s199 = scalar_select %p198, %s197, 15
      %s200 = scalar_lea.vmem %s1, %s199
      %p201 = pneg %p63
      %p202 = pneg %p60
      %s203 = smul.u32 8, %s16
      %p204 = scmp.lt.s32.totalorder %s203, 15
      %s205 = scalar_select %p204, %s203, 15
      %s206 = scalar_lea.vmem %s2, %s205
      %p207 = pneg %p89
      %p208 = pneg %p86
      %p209 = pneg %p115
      %p210 = pneg %p112
      %s211 = smul.u32 8, %s16
      %p212 = scmp.lt.s32.totalorder %s211, 15
      %s213 = scalar_select %p212, %s211, 15
      %s214 = scalar_lea.vmem %s3, %s213
      %p215 = pneg %p141
      %p216 = pneg %p138
      %s217 = smul.u32 8, %s16
      %p218 = scmp.lt.s32.totalorder %s217, 15
      %s219 = scalar_select %p218, %s217, 15
      %s220 = scalar_lea.vmem %s4, %s219
      %s221 = smul.u32 8, %s16
      %p222 = scmp.lt.s32.totalorder %s221, 15
      %s223 = scalar_select %p222, %s221, 15
      %s224 = scalar_lea.vmem %s0, %s223
      %s225 = smul.u32 8, %s16
      %s226 = smul.u32 8, %s16
      %p227 = scmp.lt.s32.totalorder %s226, 15
      %s228 = scalar_select %p227, %s226, 15
      %s229 = scalar_lea.vmem %s1, %s228
      %s230 = smul.u32 8, %s16
      %s231 = smul.u32 8, %s16
      %p232 = scmp.lt.s32.totalorder %s231, 15
      %s233 = scalar_select %p232, %s231, 15
      %s234 = scalar_lea.vmem %s2, %s233
      %s235 = smul.u32 8, %s16
      %s236 = smul.u32 8, %s16
      %p237 = scmp.lt.s32.totalorder %s236, 15
      %s238 = scalar_select %p237, %s236, 15
      %s239 = scalar_lea.vmem %s3, %s238
      %s240 = smul.u32 8, %s16
      %s241 = smul.u32 8, %s16
      %p242 = scmp.lt.s32.totalorder %s241, 15
      %s243 = scalar_select %p242, %s241, 15
      %s244 = scalar_lea.vmem %s4, %s243
      %s245 = smul.u32 8, %s16
      %v246 = vld [vmem:[%s229] sm:$0xff]
      %v247 = vld [vmem:[%s234] sm:$0xff]
      %v248 = vld [vmem:[%s224] sm:$0xff]
      %v249 = vsub.f32 %v247, %v248
      %v250 = vadd.f32 %v249, %v246
      %251 = vst [vmem:[%s239] sm:$0xff] %v250
      %v252 = vmul.f32 %v250, 0.0625
      %253 = vst [vmem:[%s244] sm:$0xff] %v252
      %s254 = smul.u32 8, %s16
      %p255 = scmp.lt.s32.totalorder %s254, 15
      %s256 = scalar_select %p255, %s254, 15
      %s257 = scalar_lea.vmem %s3, %s256
      %s258 = smul.u32 8, %s16
      %p259 = scmp.lt.s32.totalorder %s258, 15
      %s260 = scalar_select %p259, %s258, 15
      %s261 = scalar_lea.vmem %s4, %s260
      // Predicated region
      $region33: #{_moving_average_step.1} parent=31 // pred_check
        %p262 = pneg %p112
      $region34: #{_moving_average_step.1} parent=31 // pred_check_branch
        %264 = sbr.rel (%p262) target = $region36
      $region35: #{_moving_average_step.1} parent=31 // pred_region
        %s265 = smul.u32 8, %s16
      $region36: #{_moving_average_step.1} parent=31 // pred_fallthru
        _
      // Predicated region
      $region37: #{_moving_average_step.1} parent=31 // pred_check
        %p266 = pneg %p138
      $region38: #{_moving_average_step.1} parent=31 // pred_check_branch
        %268 = sbr.rel (%p266) target = $region40
      $region39: #{_moving_average_step.1} parent=31 // pred_region
        %s269 = smul.u32 8, %s16
      $region40: #{_moving_average_step.1} parent=31 // pred_fallthru
        _
    $region32: #{_moving_average_step.1} parent=5 // pred_fallthru
      _
    %p270 = scmp.le.s32.totalorder 2, %s11
    // Predicated region
    $region41: #{_moving_average_step.1} parent=5 // pred_check
      %p271 = pneg %p270
    $region42: #{_moving_average_step.1} parent=5 // pred_check_branch
      %273 = sbr.rel (%p271) target = $region44
    $region43: #{_moving_average_step.1} parent=5 // pred_region
      %s274 = ssub.s32 %s11, 2
      // Predicated region
      $region45: #{_moving_average_step.1} parent=43 // pred_check
        %p275 = pneg %p118
      $region46: #{_moving_average_step.1} parent=43 // pred_check_branch
        %277 = sbr.rel (%p275) target = $region48
      $region47: #{_moving_average_step.1} parent=43 // pred_region
        %s278 = smul.u32 8, %s17
        %p279 = scmp.lt.s32.totalorder %s278, 15
        %s280 = scalar_select %p279, %s278, 15
        %s281 = scalar_lea.vmem %s3, %s280
      $region48: #{_moving_average_step.1} parent=43 // pred_fallthru
        _
      // Predicated region
      $region49: #{_moving_average_step.1} parent=43 // pred_check
        %p282 = pneg %p144
      $region50: #{_moving_average_step.1} parent=43 // pred_check_branch
        %284 = sbr.rel (%p282) target = $region52
      $region51: #{_moving_average_step.1} parent=43 // pred_region
        %s285 = smul.u32 8, %s17
        %p286 = scmp.lt.s32.totalorder %s285, 15
        %s287 = scalar_select %p286, %s285, 15
        %s288 = scalar_lea.vmem %s4, %s287
      $region52: #{_moving_average_step.1} parent=43 // pred_fallthru
        _
    $region44: #{_moving_average_step.1} parent=5 // pred_fallthru
      _
  $region6: #{_moving_average_step.1} parent=0 // loop_footer
    %s15 = sadd.s32 1, %s11
  $region7: #{_moving_average_step.1} parent=0 // loop_footer_branch
    %10 = sbr.rel target = $region3
  $region8: #{_moving_average_step.1} parent=0 // loop_exit
    _

</llo_original>
